<compile_context>
chip_gen: v6e
topology: v6e:2x2x1
jax: 0.10.0
libtpu: 0.0.40
codegen_flags: <defaults>
</compile_context>

<pallas_src>
import functools

import jax
import jax.numpy as jnp
from jax.experimental import pallas as pl
from jax.experimental.pallas import tpu as pltpu


def _round_up(n, m):
    return ((n + m - 1) // m) * m


def _pick_batch_tile(B, block_batch):
    """Pick the batch tile: big tiles for roofline fraction, low padding waste,
    and >= 2 grid steps when B allows it (so v7x's 2 TCs both get work)."""
    B8 = _round_up(B, 8)
    best_tb, best_cost = 8, None
    for tb in (1024, 512, 384, 256, 128, 64, 32, 16, 8):
        if tb > block_batch:
            continue
        tb = min(tb, B8)
        bp = _round_up(B8, tb)
        steps = bp // tb
        # cost = padded rows actually processed
        #        + per-step overhead (~a few rows' worth of HBM time each)
        #        + penalty for a single-step grid (half of a v7x chip idles).
        cost = bp + 16 * steps + (B8 // 2 if (steps == 1 and B8 > 8) else 0)
        if best_cost is None or cost < best_cost:
            best_tb, best_cost = tb, cost
    return best_tb


# ---------------------------------------------------------------------------
# Fused kernel:  h = x;  for each layer: h = relu(h @ W + b);  out = h
# refs = (x_ref, w0_ref, b0_ref, w1_ref, b1_ref, ..., out_ref)
# ---------------------------------------------------------------------------
def _make_fused_mlp_kernel(n_layers, compute_dtype):
    def kernel(*refs):
        x_ref, out_ref = refs[0], refs[-1]
        # Carry activations in the weights' dtype (bf16 on the fast path) so a
        # (TB, 128k) intermediate needs half the vregs / spill traffic.
        h = x_ref[...].astype(compute_dtype)
        for i in range(n_layers):
            w_ref = refs[1 + 2 * i]
            b_ref = refs[2 + 2 * i]
            # MXU matmul (K = true Din for the first layer), f32 accumulate.
            y = jnp.dot(h, w_ref[...], preferred_element_type=jnp.float32)
            # f32 epilogue (bias + ReLU): required on v5e (no bf16 VPU), free elsewhere.
            y = jnp.maximum(y + b_ref[...].astype(jnp.float32), 0.0)
            h = y if i == n_layers - 1 else y.astype(compute_dtype)
        out_ref[...] = h.astype(out_ref.dtype)
    return kernel


@functools.partial(jax.jit, static_argnames=("out_dim", "block_batch",
                                             "slice_output", "single_buffer_weights"))
def basenet_forward(x, padded_params, *, out_dim, block_batch=1024,
                    slice_output=True, single_buffer_weights=False):
    """Fused BaseNet forward.

    padded_params: list of (W_p, b_p).  W_p: (K_i, Dout_i_p), b_p: (1, Dout_i_p)
    where Dout_i_p is Dout padded to a multiple of 128 and K_0 is the TRUE input
    dim (no feature pad of x); for i > 0, K_i == Dout_{i-1}_p with zero pad rows.
    """
    B, Din = x.shape
    n_layers = len(padded_params)
    assert padded_params[0][0].shape[0] == Din, "first layer K must equal true Din"
    Dlast_p = padded_params[-1][0].shape[1]
    compute_dtype = padded_params[0][0].dtype

    TB = _pick_batch_tile(B, block_batch)
    Bp = _round_up(_round_up(B, 8), TB)

    # Only pad the batch axis, and only when actually needed (no extra HBM pass
    # when Bp == B, which is the common inference case).
    x_in = x if Bp == B else jnp.zeros((Bp, Din), x.dtype).at[:B].set(x)

    itemsize = lambda a: jnp.dtype(a.dtype).itemsize
    _resident = lambda i: (0, 0)

    inputs = [x_in]
    in_specs = [pl.BlockSpec((TB, Din), lambda i: (i, 0))]
    vmem_est = 2 * TB * Din * itemsize(x_in)                    # double-buffered x tile
    wbuf = 1 if single_buffer_weights else 2
    for w_p, b_p in padded_params:
        inputs += [w_p, b_p]
        if single_buffer_weights and hasattr(pl, "Buffered"):
            # Resident blocks (constant index_map) are never re-fetched; a single
            # buffer halves their VMEM footprint (matters on v7x's 64 MiB VMEM).
            in_specs += [pl.BlockSpec(w_p.shape, _resident, pipeline_mode=pl.Buffered(1)),
                         pl.BlockSpec(b_p.shape, _resident, pipeline_mode=pl.Buffered(1))]
        else:
            in_specs += [pl.BlockSpec(w_p.shape, _resident),
                         pl.BlockSpec(b_p.shape, _resident)]
        vmem_est += wbuf * (w_p.size * itemsize(w_p) + b_p.size * itemsize(b_p))
    vmem_est += 2 * TB * Dlast_p * itemsize(x)                  # double-buffered out tile
    vmem_est += 4 * TB * Dlast_p * 4                            # f32 intermediate headroom
    vmem_limit = int(min(max(vmem_est + (2 << 20), 32 << 20), 64 << 20))

    out_p = pl.pallas_call(
        _make_fused_mlp_kernel(n_layers, compute_dtype),
        out_shape=jax.ShapeDtypeStruct((Bp, Dlast_p), x.dtype),
        grid_spec=pl.GridSpec(
            grid=(Bp // TB,),
            in_specs=in_specs,
            out_specs=pl.BlockSpec((TB, Dlast_p), lambda i: (i, 0)),
        ),
        compiler_params=pltpu.CompilerParams(
            dimension_semantics=("parallel",),
            vmem_limit_bytes=vmem_limit),
    )(*inputs)

    if not slice_output:
        # Consumer accepts the (Bp, Dlast_p) lane-padded slab: no extra HBM pass.
        return out_p
    # Batch slice is a no-op when Bp == B; the feature slice costs one extra HBM
    # copy of the output -- pass slice_output=False if downstream tolerates pad lanes.
    return out_p[:B, :out_dim]


# ---------------------------------------------------------------------------
# Deterministic parameter init mirroring layer_init():
#   orthogonal_(weight) * w_scale, bias = 0
# ---------------------------------------------------------------------------
def orthogonal_init(key, rows, cols, scale=1.0):
    """Matches torch.nn.init.orthogonal_ semantics for a (rows, cols) matrix."""
    transpose = rows < cols
    shape = (cols, rows) if transpose else (rows, cols)
    a = jax.random.normal(key, shape, dtype=jnp.float32)
    q, r = jnp.linalg.qr(a)
    # Non-negative R diagonal, as torch does.  (A zero diagonal entry would zero a
    # column; probability ~0 and torch.nn.init.orthogonal_ shares the behavior.)
    q = q * jnp.sign(jnp.diag(r))[None, :]
    if transpose:
        q = q.T
    return scale * q


def make_basenet_params(key, state_dim, hid_layers, dtype=jnp.float32):
    """Returns (padded kernel params in `dtype`, unpadded f32 reference params).

    Layer i weight is stored as (K_i, Dout_i_p): K_0 = state_dim (unpadded, so the
    kernel consumes x with its true Din), K_{i>0} = previous layer's padded Dout.
    Padded rows/cols and bias lanes are zero, so padded lanes stay exactly zero
    through bias + ReLU.
    """
    dims = [state_dim] + list(hid_layers)
    padded, ref = [], []
    k_in = state_dim
    for din, dout in zip(dims[:-1], dims[1:]):
        key, sub = jax.random.split(key)
        w = orthogonal_init(sub, dout, din, scale=1.0)     # torch layout (dout, din)
        b = jnp.zeros((dout,), jnp.float32)
        w_t = w.T                                          # (din, dout) so kernel does x @ W
        ref.append((w_t, b))
        dout_p = _round_up(dout, 128)
        w_p = jnp.zeros((k_in, dout_p), dtype).at[:din, :dout].set(w_t.astype(dtype))
        b_p = jnp.zeros((1, dout_p), dtype).at[0, :dout].set(b.astype(dtype))
        padded.append((w_p, b_p))
        k_in = dout_p                                      # next layer's K
    return padded, ref


# ---------------------------------------------------------------------------
# Pure-JAX reference (matches BaseNet.forward: gate applied after every layer).
# ---------------------------------------------------------------------------
def basenet_forward_ref(x, ref_params):
    for w_t, b in ref_params:
        x = jnp.maximum(x @ w_t + b, 0.0)
    return x


if __name__ == "__main__":
    key = jax.random.PRNGKey(0)
    kx, kp = jax.random.split(key)

    batch = 8
    state_dim = 32
    hid_layers = [64, 32]           # BaseNet(state_dim=32, hid_layers=[64, 32])
    out_dim = hid_layers[-1]

    x = jax.random.normal(kx, (batch, state_dim), dtype=jnp.float32)

    # f32 path (bit-faithful to the reference).
    params_f32, ref_params = make_basenet_params(kp, state_dim, hid_layers,
                                                 dtype=jnp.float32)
    out = jax.block_until_ready(basenet_forward(x, params_f32, out_dim=out_dim))
    ref = basenet_forward_ref(x, ref_params)
    assert out.shape == (batch, out_dim)
    assert jnp.allclose(out, ref, atol=1e-5, rtol=1e-5), "f32 mismatch vs reference"

    # bf16 path (v5e/v6e/v7x MXU fast path): bf16 weights AND bf16 inter-layer
    # activations; f32 MXU accumulate + f32 bias/ReLU epilogue.
    params_bf16, _ = make_basenet_params(kp, state_dim, hid_layers,
                                         dtype=jnp.bfloat16)
    x_bf16 = x.astype(jnp.bfloat16)   # upstream layers would already emit bf16
    out_bf16 = jax.block_until_ready(basenet_forward(x_bf16, params_bf16,
                                                     out_dim=out_dim))
    assert out_bf16.shape == (batch, out_dim)
    assert jnp.allclose(out_bf16.astype(jnp.float32), ref, atol=0.15, rtol=0.1), \
        "bf16 mismatch vs reference"

    print("KERNEL_OK")
</pallas_src>

<mosaic_0001>
module attributes {stable_mosaic.version = 11 : i64} {
  func.func @kernel(%arg0: i32, %arg1: memref<8x32xf32, #tpu.memory_space<vmem>>, %arg2: memref<32x128xf32, #tpu.memory_space<vmem>>, %arg3: memref<1x128xf32, #tpu.memory_space<vmem>>, %arg4: memref<128x128xf32, #tpu.memory_space<vmem>>, %arg5: memref<1x128xf32, #tpu.memory_space<vmem>>, %arg6: memref<8x128xf32, #tpu.memory_space<vmem>>) attributes {dimension_semantics = [#tpu.dimension_semantics<parallel>], iteration_bounds = array<i64: 1>, scalar_prefetch = 0 : i64, scratch_operands = 0 : i64, tpu.core_type = #tpu.core_type<tc>, window_params = [{transform_indices = @transform_0, window_bounds = array<i64: 8, 32>}, {pipeline_mode = #tpu.pipeline_mode<synchronous>, transform_indices = @transform_1, window_bounds = array<i64: 32, 128>}, {pipeline_mode = #tpu.pipeline_mode<synchronous>, transform_indices = @transform_2, window_bounds = array<i64: 1, 128>}, {pipeline_mode = #tpu.pipeline_mode<synchronous>, transform_indices = @transform_3, window_bounds = array<i64: 128, 128>}, {pipeline_mode = #tpu.pipeline_mode<synchronous>, transform_indices = @transform_4, window_bounds = array<i64: 1, 128>}, {transform_indices = @transform_5, window_bounds = array<i64: 8, 128>}]} {
    %c0 = arith.constant 0 : index
    %c0_0 = arith.constant 0 : index
    %0 = vector.load %arg1[%c0, %c0_0] : memref<8x32xf32, #tpu.memory_space<vmem>>, vector<8x32xf32>
    %c0_1 = arith.constant 0 : index
    %c0_2 = arith.constant 0 : index
    %1 = vector.load %arg2[%c0_1, %c0_2] : memref<32x128xf32, #tpu.memory_space<vmem>>, vector<32x128xf32>
    %cst = arith.constant dense<0.000000e+00> : vector<8x128xf32>
    %2 = tpu.matmul %0, %1, %cst {dimension_numbers = #tpu.dot_dimension_numbers<[1], [0], [0], [1], [0, 0, 1, 1], [], []>} : vector<8x32xf32>, vector<32x128xf32>, vector<8x128xf32> -> vector<8x128xf32>
    %c0_3 = arith.constant 0 : index
    %c0_4 = arith.constant 0 : index
    %3 = vector.load %arg3[%c0_3, %c0_4] : memref<1x128xf32, #tpu.memory_space<vmem>>, vector<1x128xf32>
    %4 = vector.broadcast %3 : vector<1x128xf32> to vector<8x128xf32>
    %5 = arith.addf %2, %4 : vector<8x128xf32>
    %cst_5 = arith.constant 0.000000e+00 : f32
    %6 = vector.broadcast %cst_5 : f32 to vector<8x128xf32>
    %7 = arith.maximumf %5, %6 : vector<8x128xf32>
    %c0_6 = arith.constant 0 : index
    %c0_7 = arith.constant 0 : index
    %8 = vector.load %arg4[%c0_6, %c0_7] : memref<128x128xf32, #tpu.memory_space<vmem>>, vector<128x128xf32>
    %cst_8 = arith.constant dense<0.000000e+00> : vector<8x128xf32>
    %9 = tpu.matmul %7, %8, %cst_8 {dimension_numbers = #tpu.dot_dimension_numbers<[1], [0], [0], [1], [0, 0, 1, 1], [], []>} : vector<8x128xf32>, vector<128x128xf32>, vector<8x128xf32> -> vector<8x128xf32>
    %c0_9 = arith.constant 0 : index
    %c0_10 = arith.constant 0 : index
    %10 = vector.load %arg5[%c0_9, %c0_10] : memref<1x128xf32, #tpu.memory_space<vmem>>, vector<1x128xf32>
    %11 = vector.broadcast %10 : vector<1x128xf32> to vector<8x128xf32>
    %12 = arith.addf %9, %11 : vector<8x128xf32>
    %cst_11 = arith.constant 0.000000e+00 : f32
    %13 = vector.broadcast %cst_11 : f32 to vector<8x128xf32>
    %14 = arith.maximumf %12, %13 : vector<8x128xf32>
    %c0_12 = arith.constant 0 : index
    %c0_13 = arith.constant 0 : index
    %15 = vector.load %arg6[%c0_12, %c0_13] : memref<8x128xf32, #tpu.memory_space<vmem>>, vector<8x128xf32>
    tpu.vector_store %arg6[%c0_12, %c0_13], %14 {strides = array<i32>} : memref<8x128xf32, #tpu.memory_space<vmem>>, vector<8x128xf32>,
    return
  }
  func.func @transform_0(%arg0: i32) -> (i32, i32) {
    %c0_i32 = arith.constant 0 : i32
    %c0_i32_0 = arith.constant 0 : i32
    return %arg0, %c0_i32 : i32, i32
  }
  func.func @transform_1(%arg0: i32) -> (i32, i32) {
    %c0_i32 = arith.constant 0 : i32
    %c0_i32_0 = arith.constant 0 : i32
    %c0_i32_1 = arith.constant 0 : i32
    return %c0_i32, %c0_i32_0 : i32, i32
  }
  func.func @transform_2(%arg0: i32) -> (i32, i32) {
    %c0_i32 = arith.constant 0 : i32
    %c0_i32_0 = arith.constant 0 : i32
    %c0_i32_1 = arith.constant 0 : i32
    return %c0_i32, %c0_i32_0 : i32, i32
  }
  func.func @transform_3(%arg0: i32) -> (i32, i32) {
    %c0_i32 = arith.constant 0 : i32
    %c0_i32_0 = arith.constant 0 : i32
    %c0_i32_1 = arith.constant 0 : i32
    return %c0_i32, %c0_i32_0 : i32, i32
  }
  func.func @transform_4(%arg0: i32) -> (i32, i32) {
    %c0_i32 = arith.constant 0 : i32
    %c0_i32_0 = arith.constant 0 : i32
    %c0_i32_1 = arith.constant 0 : i32
    return %c0_i32, %c0_i32_0 : i32, i32
  }
  func.func @transform_5(%arg0: i32) -> (i32, i32) {
    %c0_i32 = arith.constant 0 : i32
    %c0_i32_0 = arith.constant 0 : i32
    return %arg0, %c0_i32 : i32, i32
  }
}

</mosaic_0001>

<llo_original>
// kernel: basenet_forward.1
$region0: #{basenet_forward.1}
  #allocation0 [shape = 'u32[]', space=smem, size = 0x4, offset = 0x4, fixed_abs, tag = 'smem constant byte address 0x4 - core index']
  #allocation1 [shape = 'u32[144,128]{1,0:T(1,128)}', space=vmem, size = 0x12000, scoped, tag = 'internal scratch']
  %s0 = inlined_call_operand.hbm [shape: f32[8,32], index: 0, kind: input, shape index: {}]
  %s1 = inlined_call_operand.hbm [shape: f32[32,128], index: 1, kind: input, shape index: {}]
  %s2 = inlined_call_operand.vmem [shape: f32[1,128], index: 2, kind: input, shape index: {}]
  %s3 = inlined_call_operand.hbm [shape: f32[128,128], index: 3, kind: input, shape index: {}]
  %s4 = inlined_call_operand.vmem [shape: f32[1,128], index: 4, kind: input, shape index: {}]
  %s5 = inlined_call_operand.hbm [shape: f32[8,128], index: 5, kind: output, shape index: {}]
  %s6 = sld [smem:[#allocation0]]
  $region42: #{basenet_forward.1} parent=0
    _
  %s8 = ssub.s32 1, %s6
  %s9 = scalar_select 0, %s8, %s6
  $region1: #{basenet_forward.1} parent=0
    #allocation2 [shape = 'u8[4096]{0}', space=vmem, size = 0x1000, scoped, tag = 'input window, operand 0, single buffered']
    #allocation3 [shape = 's32[1]{0}', space=sflag, size = 0x4, scoped, tag = 'scoped memory for basenet_forward.1']
    #allocation4 [shape = 's32[1]{0}', space=sflag, size = 0x4, scoped, tag = 'scoped memory for basenet_forward.1']
    #allocation5 [shape = 'u8[16384]{0}', space=vmem, size = 0x4000, scoped, tag = 'input window, operand 1, single buffered']
    #allocation6 [shape = 's32[1]{0}', space=sflag, size = 0x4, scoped, tag = 'scoped memory for basenet_forward.1']
    #allocation7 [shape = 'u8[65536]{0}', space=vmem, size = 0x10000, scoped, tag = 'input window, operand 3, single buffered']
    #allocation8 [shape = 'u8[4096]{0}', space=vmem, size = 0x1000, scoped, tag = 'output window, operand 0, single buffered']
    %10 = vsyncpa [#allocation3], 0
    %11 = vsyncpa [#allocation6], 0
    %12 = vsyncpa [#allocation4], 0
    // Predicated region
    $region2: #{basenet_forward.1} parent=1 // pred_check
      _
    $region3: #{basenet_forward.1} parent=1 // pred_check_branch
      %14 = sbr.rel (0) target = $region5
    $region4: #{basenet_forward.1} parent=1 // pred_region
      %s16 = ssub.s32 128, 128
      %17 = vsyncadd [#allocation3], %s16
      %s19 = sshll.u32 [#allocation2], 4
      %s20 = int_to_ptr.vmem [resolvable:$true] %s19
      %22 = dma.hbm_to_vmem [thread:$0]  %s0, 128, %s20, [#allocation3]
    $region5: #{basenet_forward.1} parent=1 // pred_fallthru
      _
    // Predicated region
    $region6: #{basenet_forward.1} parent=1 // pred_check
      _
    $region7: #{basenet_forward.1} parent=1 // pred_check_branch
      %24 = sbr.rel (0) target = $region9
    $region8: #{basenet_forward.1} parent=1 // pred_region
      %s26 = ssub.s32 512, 512
      %27 = vsyncadd [#allocation6], %s26
      %s28 = sshll.u32 [#allocation5], 4
      %s29 = int_to_ptr.vmem [resolvable:$true] %s28
      %34 = dma.hbm_to_vmem [thread:$0]  %s1, 512, %s29, [#allocation6], 128, 128, 8
    $region9: #{basenet_forward.1} parent=1 // pred_fallthru
      _
    // Predicated region
    $region10: #{basenet_forward.1} parent=1 // pred_check
      _
    $region11: #{basenet_forward.1} parent=1 // pred_check_branch
      %36 = sbr.rel (0) target = $region13
    $region12: #{basenet_forward.1} parent=1 // pred_region
      _
    $region13: #{basenet_forward.1} parent=1 // pred_fallthru
      _
    // Predicated region
    $region14: #{basenet_forward.1} parent=1 // pred_check
      _
    $region15: #{basenet_forward.1} parent=1 // pred_check_branch
      %38 = sbr.rel (0) target = $region17
    $region16: #{basenet_forward.1} parent=1 // pred_region
      %s40 = ssub.s32 2048, 2048
      %41 = vsyncadd [#allocation6], %s40
      %s42 = sshll.u32 [#allocation7], 4
      %s43 = int_to_ptr.vmem [resolvable:$true] %s42
      %48 = dma.hbm_to_vmem [thread:$0]  %s3, 2048, %s43, [#allocation6], 128, 128, 8
    $region17: #{basenet_forward.1} parent=1 // pred_fallthru
      _
    // Predicated region
    $region18: #{basenet_forward.1} parent=1 // pred_check
      _
    $region19: #{basenet_forward.1} parent=1 // pred_check_branch
      %50 = sbr.rel (0) target = $region21
    $region20: #{basenet_forward.1} parent=1 // pred_region
      _
    $region21: #{basenet_forward.1} parent=1 // pred_fallthru
      _
    // Predicated region
    $region22: #{basenet_forward.1} parent=1 // pred_check
      _
    $region23: #{basenet_forward.1} parent=1 // pred_check_branch
      %52 = sbr.rel (0) target = $region25
    $region24: #{basenet_forward.1} parent=1 // pred_region
      %53 = dma.done [#allocation3], 128
    $region25: #{basenet_forward.1} parent=1 // pred_fallthru
      _
    // Predicated region
    $region26: #{basenet_forward.1} parent=1 // pred_check
      _
    $region27: #{basenet_forward.1} parent=1 // pred_check_branch
      %55 = sbr.rel (0) target = $region29
    $region28: #{basenet_forward.1} parent=1 // pred_region
      %56 = dma.done [#allocation6], 512
    $region29: #{basenet_forward.1} parent=1 // pred_fallthru
      _
    // Predicated region
    $region30: #{basenet_forward.1} parent=1 // pred_check
      _
    $region31: #{basenet_forward.1} parent=1 // pred_check_branch
      %58 = sbr.rel (0) target = $region33
    $region32: #{basenet_forward.1} parent=1 // pred_region
      %59 = dma.done [#allocation6], 2048
    $region33: #{basenet_forward.1} parent=1 // pred_fallthru
      _
    %v60 = vld [vmem:[#allocation2] sm:$0xff]
    %v61 = vld [vmem:[#allocation5] sm:$0xff]
    %v62 = vld [vmem:[#allocation5 + $0x8] sm:$0xff]
    %v63 = vld [vmem:[#allocation5 + $0x10] sm:$0xff]
    %v64 = vld [vmem:[#allocation5 + $0x18] sm:$0xff]
    %v65 = vld [vmem:[%s2] sm:$0x1]
    %v67 = vlaneseq
    %v68 = vshrl.u32 %v67, 7
    %v69 = vsub.s32 0, %v68
    %v70 = vrot.slane %v65, %v69
    %vm72 = vcmask 261120
    %v74 = vsel %vm72, %v60, 0
    %76 = vmatprep.subr.mxu0 0.0
    %77 = vmatpush1.msra.mxu0 0.0
    %78 = vmatprep.subr.mxu0 0.0
    %79 = vmatpush1.msra.mxu0 0.0
    %80 = vmatprep.subr.mxu0 0.0
    %81 = vmatpush1.msra.mxu0 0.0
    %82 = vmatprep.subr.mxu0 0.0
    %83 = vmatpush1.msra.mxu0 0.0
    %84 = vmatprep.subr.mxu0 0.0
    %85 = vmatpush1.msra.mxu0 0.0
    %86 = vmatprep.subr.mxu0 0.0
    %87 = vmatpush1.msra.mxu0 0.0
    %88 = vmatprep.subr.mxu0 0.0
    %89 = vmatpush1.msra.mxu0 0.0
    %90 = vmatprep.subr.mxu0 0.0
    %91 = vmatpush1.msra.mxu0 0.0
    %92 = vmatprep.subr.mxu0 0.0
    %93 = vmatpush1.msra.mxu0 0.0
    %94 = vmatprep.subr.mxu0 0.0
    %95 = vmatpush1.msra.mxu0 0.0
    %96 = vmatprep.subr.mxu0 0.0
    %97 = vmatpush1.msra.mxu0 0.0
    %98 = vmatprep.subr.mxu0 0.0
    %99 = vmatpush1.msra.mxu0 0.0
    %100 = vmatprep.subr.mxu0 0.0
    %101 = vmatpush1.msra.mxu0 %v64
    %102 = vmatprep.subr.mxu0 0.0
    %103 = vmatpush1.msra.mxu0 %v63
    %104 = vmatprep.subr.mxu0 0.0
    %105 = vmatpush1.msra.mxu0 %v62
    %106 = vmatprep.subr.mxu0 0.0
    %107 = vmatpush1.msra.mxu0 %v61
    %108 = vmatprep.subr.mxu0 0.0
    %109 = vmatpush2.msra.mxu0 0.0
    %110 = vmatprep.subr.mxu0 0.0
    %111 = vmatpush2.msra.mxu0 0.0
    %112 = vmatprep.subr.mxu0 0.0
    %113 = vmatpush2.msra.mxu0 0.0
    %114 = vmatprep.subr.mxu0 0.0
    %115 = vmatpush2.msra.mxu0 0.0
    %116 = vmatprep.subr.mxu0 0.0
    %117 = vmatpush2.msra.mxu0 0.0
    %118 = vmatprep.subr.mxu0 0.0
    %119 = vmatpush2.msra.mxu0 0.0
    %120 = vmatprep.subr.mxu0 0.0
    %121 = vmatpush2.msra.mxu0 0.0
    %122 = vmatprep.subr.mxu0 0.0
    %123 = vmatpush2.msra.mxu0 0.0
    %124 = vmatprep.subr.mxu0 0.0
    %125 = vmatpush2.msra.mxu0 0.0
    %126 = vmatprep.subr.mxu0 0.0
    %127 = vmatpush2.msra.mxu0 0.0
    %128 = vmatprep.subr.mxu0 0.0
    %129 = vmatpush2.msra.mxu0 0.0
    %130 = vmatprep.subr.mxu0 0.0
    %131 = vmatpush2.msra.mxu0 0.0
    %132 = vmatprep.subr.mxu0 0.0
    %133 = vmatpush2.msra.mxu0 0.0
    %134 = vmatprep.subr.mxu0 0.0
    %135 = vmatpush2.msra.mxu0 0.0
    %136 = vmatprep.subr.mxu0 0.0
    %137 = vmatpush2.msra.mxu0 0.0
    %138 = vmatprep.subr.mxu0 0.0
    %139 = vmatpush2.msra.mxu0 0.0
    %140 = vmatprep.mubr.f32.mxu0 0.0
    %141 = vmatmul.mubr.f32.gmra.mxu0 %v74
    %v142 = vpop.f32.mrf.mxu0
    %v143 = vadd.f32 %v70, %v142
    %v144 = vpop.f32.mrf.mxu0
    %145 = vdwg.mxu0
    %v146 = vmax.f32 %v143, 0.0
    %v147 = vld [vmem:[#allocation7] sm:$0xff]
    %v148 = vld [vmem:[#allocation7 + $0x8] sm:$0xff]
    %v149 = vld [vmem:[#allocation7 + $0x10] sm:$0xff]
    %v150 = vld [vmem:[#allocation7 + $0x18] sm:$0xff]
    %v151 = vld [vmem:[#allocation7 + $0x20] sm:$0xff]
    %v152 = vld [vmem:[#allocation7 + $0x28] sm:$0xff]
    %v153 = vld [vmem:[#allocation7 + $0x30] sm:$0xff]
    %v154 = vld [vmem:[#allocation7 + $0x38] sm:$0xff]
    %v155 = vld [vmem:[#allocation7 + $0x40] sm:$0xff]
    %v156 = vld [vmem:[#allocation7 + $0x48] sm:$0xff]
    %v157 = vld [vmem:[#allocation7 + $0x50] sm:$0xff]
    %v158 = vld [vmem:[#allocation7 + $0x58] sm:$0xff]
    %v159 = vld [vmem:[#allocation7 + $0x60] sm:$0xff]
    %v160 = vld [vmem:[#allocation7 + $0x68] sm:$0xff]
    %v161 = vld [vmem:[#allocation7 + $0x70] sm:$0xff]
    %v162 = vld [vmem:[#allocation7 + $0x78] sm:$0xff]
    %v163 = vld [vmem:[%s4] sm:$0x1]
    %v165 = vlaneseq
    %v166 = vshrl.u32 %v165, 7
    %v167 = vsub.s32 0, %v166
    %v168 = vrot.slane %v163, %v167
    %170 = vmatprep.subr.mxu0 0.0
    %171 = vmatpush1.msra.mxu0 %v162
    %172 = vmatprep.subr.mxu0 0.0
    %173 = vmatpush1.msra.mxu0 %v161
    %174 = vmatprep.subr.mxu0 0.0
    %175 = vmatpush1.msra.mxu0 %v160
    %176 = vmatprep.subr.mxu0 0.0
    %177 = vmatpush1.msra.mxu0 %v159
    %178 = vmatprep.subr.mxu0 0.0
    %179 = vmatpush1.msra.mxu0 %v158
    %180 = vmatprep.subr.mxu0 0.0
    %181 = vmatpush1.msra.mxu0 %v157
    %182 = vmatprep.subr.mxu0 0.0
    %183 = vmatpush1.msra.mxu0 %v156
    %184 = vmatprep.subr.mxu0 0.0
    %185 = vmatpush1.msra.mxu0 %v155
    %186 = vmatprep.subr.mxu0 0.0
    %187 = vmatpush1.msra.mxu0 %v154
    %188 = vmatprep.subr.mxu0 0.0
    %189 = vmatpush1.msra.mxu0 %v153
    %190 = vmatprep.subr.mxu0 0.0
    %191 = vmatpush1.msra.mxu0 %v152
    %192 = vmatprep.subr.mxu0 0.0
    %193 = vmatpush1.msra.mxu0 %v151
    %194 = vmatprep.subr.mxu0 0.0
    %195 = vmatpush1.msra.mxu0 %v150
    %196 = vmatprep.subr.mxu0 0.0
    %197 = vmatpush1.msra.mxu0 %v149
    %198 = vmatprep.subr.mxu0 0.0
    %199 = vmatpush1.msra.mxu0 %v148
    %200 = vmatprep.subr.mxu0 0.0
    %201 = vmatpush1.msra.mxu0 %v147
    %202 = vmatprep.subr.mxu0 0.0
    %203 = vmatpush2.msra.mxu0 0.0
    %204 = vmatprep.subr.mxu0 0.0
    %205 = vmatpush2.msra.mxu0 0.0
    %206 = vmatprep.subr.mxu0 0.0
    %207 = vmatpush2.msra.mxu0 0.0
    %208 = vmatprep.subr.mxu0 0.0
    %209 = vmatpush2.msra.mxu0 0.0
    %210 = vmatprep.subr.mxu0 0.0
    %211 = vmatpush2.msra.mxu0 0.0
    %212 = vmatprep.subr.mxu0 0.0
    %213 = vmatpush2.msra.mxu0 0.0
    %214 = vmatprep.subr.mxu0 0.0
    %215 = vmatpush2.msra.mxu0 0.0
    %216 = vmatprep.subr.mxu0 0.0
    %217 = vmatpush2.msra.mxu0 0.0
    %218 = vmatprep.subr.mxu0 0.0
    %219 = vmatpush2.msra.mxu0 0.0
    %220 = vmatprep.subr.mxu0 0.0
    %221 = vmatpush2.msra.mxu0 0.0
    %222 = vmatprep.subr.mxu0 0.0
    %223 = vmatpush2.msra.mxu0 0.0
    %224 = vmatprep.subr.mxu0 0.0
    %225 = vmatpush2.msra.mxu0 0.0
    %226 = vmatprep.subr.mxu0 0.0
    %227 = vmatpush2.msra.mxu0 0.0
    %228 = vmatprep.subr.mxu0 0.0
    %229 = vmatpush2.msra.mxu0 0.0
    %230 = vmatprep.subr.mxu0 0.0
    %231 = vmatpush2.msra.mxu0 0.0
    %232 = vmatprep.subr.mxu0 0.0
    %233 = vmatpush2.msra.mxu0 0.0
    %234 = vmatprep.mubr.f32.mxu0 0.0
    %235 = vmatmul.mubr.f32.gmra.mxu0 %v146
    %v236 = vpop.f32.mrf.mxu0
    %v237 = vadd.f32 %v168, %v236
    %v238 = vpop.f32.mrf.mxu0
    %239 = vdwg.mxu0
    %v240 = vmax.f32 %v237, 0.0
    %241 = vst [vmem:[#allocation8] sm:$0xff] %v240
    // Predicated region
    $region34: #{basenet_forward.1} parent=1 // pred_check
      _
    $region35: #{basenet_forward.1} parent=1 // pred_check_branch
      %243 = sbr.rel (0) target = $region37
    $region36: #{basenet_forward.1} parent=1 // pred_region
      %s245 = ssub.s32 128, 128
      %246 = vsyncadd [#allocation4], %s245
      %s248 = sshll.u32 [#allocation8], 4
      %s249 = int_to_ptr.vmem [resolvable:$true] %s248
      %251 = dma.vmem_to_hbm [thread:$0]  %s249, 128, %s5, [#allocation4]
    $region37: #{basenet_forward.1} parent=1 // pred_fallthru
      _
    // Predicated region
    $region38: #{basenet_forward.1} parent=1 // pred_check
      _
    $region39: #{basenet_forward.1} parent=1 // pred_check_branch
      %253 = sbr.rel (0) target = $region41
    $region40: #{basenet_forward.1} parent=1 // pred_region
      %254 = dma.done [#allocation4], 128
    $region41: #{basenet_forward.1} parent=1 // pred_fallthru
      _
    %255 = vsyncpa [#allocation3], 1
    %256 = vsyncpa [#allocation6], 1
    %257 = vsyncpa [#allocation4], 1

</llo_original>
